<compile_context>
chip_gen: v6e
topology: v6e:2x2x1
jax: 0.10.0
libtpu: 0.0.40
codegen_flags: <defaults>
</compile_context>

<pallas_src>
import numpy as np
import jax
import jax.numpy as jnp
from jax import lax
from jax.experimental import pallas as pl
from jax.experimental.pallas import tpu as pltpu

ROW_ALIGN = 16  # bf16 sublane packing: keep edge-window starts 16-row aligned


def _round_up(x, m):
    return ((x + m - 1) // m) * m


def deepsets_edges_kernel(grp_base_ref,            # SMEM [num_groups] int32 (scalar prefetch)
                          lo_ref, hi_ref,          # VMEM [G, 1] int32: per-graph row range
                          feat_hbm,                # ANY  [E_rows, Dp] bf16 (contiguous edges)
                          w1_ref, b1_ref,          # fused GLU weights [Dp, 2Dp] bf16, [1, 2Dp] f32
                          scale_ref, shift_ref,    # folded eval-mode BatchNorm1d [1, Dp] f32
                          w2_ref, b2_ref,          # readout Linear [Dp, Dop] f32, [1, Dop] f32
                          o_ref,                   # [G, Dop] f32 per-group output block
                          ebuf, sem):              # scratch: VMEM (2, TE, Dp) bf16, DMA sems (2,)
    i = pl.program_id(0)
    nsteps = pl.num_programs(0)
    _, TE, Dp = ebuf.shape
    G = o_ref.shape[0]

    def group_copy(step, slot):
        base = pl.multiple_of(grp_base_ref[step], ROW_ALIGN)
        return pltpu.make_async_copy(feat_hbm.at[pl.ds(base, TE)],
                                     ebuf.at[slot], sem.at[slot])

    slot = lax.rem(i, 2)

    # Prime the pipeline on the first step.
    @pl.when(i == 0)
    def _():
        group_copy(0, 0).start()

    # Prefetch next group's edge window into the other slot.
    @pl.when(i + 1 < nsteps)
    def _():
        group_copy(i + 1, 1 - slot).start()

    # Wait for this step's edge window.
    group_copy(i, slot).wait()

    # ---- per-edge GLU: one fused bf16 MXU matmul, f32 accumulation ----------
    x = ebuf[slot]                                                    # [TE, Dp] bf16
    h = jnp.dot(x, w1_ref[...], preferred_element_type=jnp.float32) + b1_ref[...]
    e = h[:, :Dp] * jax.nn.sigmoid(h[:, Dp:])                         # [TE, Dp] f32

    # ---- per-graph edge sum: block-structured [G, TE] mask matmul (MXU) -----
    rows = lax.broadcasted_iota(jnp.int32, (G, TE), 1)                # [G, TE]
    mask = ((rows >= lo_ref[...]) & (rows < hi_ref[...])).astype(jnp.float32)
    s = jnp.dot(mask, e, preferred_element_type=jnp.float32)          # [G, Dp]

    # ---- BatchNorm1d (eval, folded) + Dropout(identity) + readout Linear ----
    bn = s * scale_ref[...] + shift_ref[...]                          # [G, Dp]
    out = jnp.dot(bn, w2_ref[...], preferred_element_type=jnp.float32) + b2_ref[...]
    o_ref[...] = out.astype(o_ref.dtype)                              # dense [G, Dop] store


def deep_sets_edges(feat, edge_counts, w1a, b1a, w1g, b1g,
                    gamma, beta, run_mean, run_var, w2, b2,
                    *, eps=1e-5, graphs_per_step=8):
    """DeepSetsEdges forward (eval mode).  Returns per-graph readout [B, d_out]."""
    counts_np = np.asarray(edge_counts, dtype=np.int64)
    B = int(counts_np.shape[0])
    E, d_in = feat.shape
    d_out = int(np.asarray(w2).shape[1])
    assert int(counts_np.sum()) == E, "sum(edge_counts) must equal feat.shape[0]"

    G = max(8, (int(graphs_per_step) // 8) * 8)   # graphs per grid step (multiple of 8)
    B_pad = _round_up(B, G)
    num_groups = B_pad // G

    Dp = _round_up(d_in, 128)                     # lane-dense feature width
    Dop = _round_up(d_out, 128)                   # lane-dense output width

    # ---- host-side group bookkeeping (edges of each graph are contiguous) ---
    counts_pad = np.zeros(B_pad, np.int64)
    counts_pad[:B] = counts_np
    offsets = np.zeros(B_pad + 1, np.int64)
    offsets[1:] = np.cumsum(counts_pad)           # offsets[g] = first edge of graph g

    grp_start = offsets[0:B_pad:G]                              # [num_groups]
    grp_base = (grp_start // ROW_ALIGN) * ROW_ALIGN             # aligned DMA start rows
    grp_end = offsets[G:B_pad + 1:G]                            # [num_groups]
    TE = _round_up(max(int((grp_end - grp_base).max()), 1), ROW_ALIGN)   # fixed window rows

    lo = (offsets[:B_pad] - np.repeat(grp_base, G)).astype(np.int32)     # [B_pad]
    hi = (lo + counts_pad).astype(np.int32)

    E_rows = _round_up(E, ROW_ALIGN) + TE         # pad so every window is in-bounds

    f32, bf16 = jnp.float32, jnp.bfloat16

    # ---- device arrays: one pad/cast pass, NO per-graph gather/repack -------
    feat_p = jnp.pad(jnp.asarray(feat, bf16), ((0, E_rows - E), (0, Dp - d_in)))
    grp_base_j = jnp.asarray(grp_base, jnp.int32)
    lo_j = jnp.asarray(lo.reshape(B_pad, 1))
    hi_j = jnp.asarray(hi.reshape(B_pad, 1))

    def pad_mat(m, rows, cols):
        m = jnp.asarray(m, f32)
        return jnp.pad(m, ((0, rows - m.shape[0]), (0, cols - m.shape[1])))

    def pad_vec(v, cols, fill=0.0):
        v = jnp.asarray(v, f32)
        return jnp.pad(v, (0, cols - v.shape[0]), constant_values=fill).reshape(1, cols)

    w1_p = jnp.concatenate([pad_mat(w1a, Dp, Dp), pad_mat(w1g, Dp, Dp)], axis=1).astype(bf16)
    b1_p = jnp.concatenate([pad_vec(b1a, Dp), pad_vec(b1g, Dp)], axis=1)        # [1, 2Dp] f32
    w2_p = pad_mat(w2, Dp, Dop)
    b2_p = pad_vec(b2, Dop)

    scale_p = pad_vec(gamma, Dp) * lax.rsqrt(pad_vec(run_var, Dp, fill=1.0) + eps)
    shift_p = pad_vec(beta, Dp) - pad_vec(run_mean, Dp) * scale_p

    grid_spec = pltpu.PrefetchScalarGridSpec(
        num_scalar_prefetch=1,                    # group base offsets -> SMEM
        grid=(num_groups,),
        in_specs=[
            pl.BlockSpec((G, 1), lambda i, gb: (i, 0)),          # lo
            pl.BlockSpec((G, 1), lambda i, gb: (i, 0)),          # hi
            pl.BlockSpec(memory_space=pl.ANY),                   # contiguous edges (HBM)
            pl.BlockSpec((Dp, 2 * Dp), lambda i, gb: (0, 0)),    # fused GLU weight (resident)
            pl.BlockSpec((1, 2 * Dp), lambda i, gb: (0, 0)),     # fused GLU bias
            pl.BlockSpec((1, Dp), lambda i, gb: (0, 0)),         # bn scale
            pl.BlockSpec((1, Dp), lambda i, gb: (0, 0)),         # bn shift
            pl.BlockSpec((Dp, Dop), lambda i, gb: (0, 0)),       # w2
            pl.BlockSpec((1, Dop), lambda i, gb: (0, 0)),        # b2
        ],
        out_specs=pl.BlockSpec((G, Dop), lambda i, gb: (i, 0)),  # disjoint dense blocks
        scratch_shapes=[pltpu.VMEM((2, TE, Dp), bf16),           # edge double-buffer
                        pltpu.SemaphoreType.DMA((2,))],
    )

    # VMEM budget estimate; raise the scoped limit only when tiles get big.
    est = (2 * TE * Dp * 2 + 2 * Dp * 2 * Dp * 2 + 2 * Dp * Dop * 4
           + 2 * G * Dop * 4 + 2 * (4 * Dp + 2 * Dop + 2 * G) * 4)
    vmem_limit = None
    if est > 24 * 2 ** 20:
        vmem_limit = int(min(2 * est, 100 * 2 ** 20))

    out = pl.pallas_call(
        deepsets_edges_kernel,
        out_shape=jax.ShapeDtypeStruct((B_pad, Dop), f32),
        grid_spec=grid_spec,
        compiler_params=pltpu.CompilerParams(
            # "arbitrary": the manual cross-step DMA prefetch is primed at step 0,
            # so the grid must run sequentially on one core.
            dimension_semantics=("arbitrary",),
            vmem_limit_bytes=vmem_limit,
        ),
    )(grp_base_j, lo_j, hi_j, feat_p, w1_p, b1_p, scale_p, shift_p, w2_p, b2_p)

    return out[:B, :d_out]


def deep_sets_edges_ref(feat, edge_counts, w1a, b1a, w1g, b1g,
                        gamma, beta, run_mean, run_var, w2, b2, eps=1e-5):
    """NumPy reference mirroring the PyTorch forward (eval mode)."""
    f = np.asarray(feat, np.float64)
    ha = f @ np.asarray(w1a, np.float64) + np.asarray(b1a, np.float64)
    hg = f @ np.asarray(w1g, np.float64) + np.asarray(b1g, np.float64)
    e = ha * (1.0 / (1.0 + np.exp(-hg)))                 # GLU
    counts = np.asarray(edge_counts)
    B = counts.shape[0]
    s = np.zeros((B, f.shape[1]), np.float64)            # dgl.sum_edges
    start = 0
    for i, n in enumerate(counts):
        s[i] = e[start:start + int(n)].sum(axis=0)
        start += int(n)
    xhat = (s - np.asarray(run_mean, np.float64)) / np.sqrt(
        np.asarray(run_var, np.float64) + eps)
    bn = np.asarray(gamma, np.float64) * xhat + np.asarray(beta, np.float64)
    # Dropout is identity in eval mode.
    return (bn @ np.asarray(w2, np.float64) + np.asarray(b2, np.float64)).astype(np.float32)


if __name__ == "__main__":
    key = jax.random.PRNGKey(0)
    d_in, d_out = 32, 16
    # 19 graphs -> 3 groups of G=8 (exercises the multi-step DMA pipeline).
    edge_counts = [3, 5, 7, 4, 1, 6, 2, 8, 5, 3, 9, 4, 2, 7, 1, 5, 6, 3, 4]
    E = sum(edge_counts)

    ks = jax.random.split(key, 11)
    feat = jax.random.normal(ks[0], (E, d_in), dtype=jnp.float32)

    s1 = 1.0 / np.sqrt(d_in)
    w1a = jax.random.normal(ks[1], (d_in, d_in), jnp.float32) * s1
    b1a = jax.random.normal(ks[2], (d_in,), jnp.float32) * 0.1
    w1g = jax.random.normal(ks[3], (d_in, d_in), jnp.float32) * s1
    b1g = jax.random.normal(ks[4], (d_in,), jnp.float32) * 0.1
    gamma = 1.0 + 0.1 * jax.random.normal(ks[5], (d_in,), jnp.float32)
    beta = 0.1 * jax.random.normal(ks[6], (d_in,), jnp.float32)
    run_mean = 0.1 * jax.random.normal(ks[7], (d_in,), jnp.float32)
    run_var = 0.5 + jax.random.uniform(ks[8], (d_in,), dtype=jnp.float32)
    w2 = jax.random.normal(ks[9], (d_in, d_out), jnp.float32) * s1
    b2 = jax.random.normal(ks[10], (d_out,), jnp.float32) * 0.1

    out = deep_sets_edges(feat, edge_counts, w1a, b1a, w1g, b1g,
                          gamma, beta, run_mean, run_var, w2, b2)
    out = jax.block_until_ready(out)

    ref = deep_sets_edges_ref(feat, edge_counts, w1a, b1a, w1g, b1g,
                              gamma, beta, run_mean, run_var, w2, b2)
    # Looser tolerance than the pure-f32 version: edge features and the GLU
    # weights deliberately run through the MXU in bf16 (f32 accumulation).
    np.testing.assert_allclose(np.asarray(out), ref, rtol=5e-2, atol=5e-2)

    print("KERNEL_OK")
</pallas_src>

<mosaic_0001>
module attributes {stable_mosaic.version = 11 : i64} {
  func.func @deepsets_edges_kernel(%arg0: i32, %arg1: memref<3xi32, #tpu.memory_space<smem>>, %arg2: memref<8x1xi32, #tpu.memory_space<vmem>>, %arg3: memref<8x1xi32, #tpu.memory_space<vmem>>, %arg4: memref<144x128xbf16, #tpu.memory_space<any>>, %arg5: memref<128x256xbf16, #tpu.memory_space<vmem>>, %arg6: memref<1x256xf32, #tpu.memory_space<vmem>>, %arg7: memref<1x128xf32, #tpu.memory_space<vmem>>, %arg8: memref<1x128xf32, #tpu.memory_space<vmem>>, %arg9: memref<128x128xf32, #tpu.memory_space<vmem>>, %arg10: memref<1x128xf32, #tpu.memory_space<vmem>>, %arg11: memref<8x128xf32, #tpu.memory_space<vmem>>, %arg12: memref<2x48x128xbf16, #tpu.memory_space<vmem>>, %arg13: memref<2x!tpu.dma_semaphore, #tpu.memory_space<semaphore_mem>>) attributes {dimension_semantics = [#tpu.dimension_semantics<arbitrary>], iteration_bounds = array<i64: 3>, scalar_prefetch = 1 : i64, scratch_operands = 2 : i64, tpu.core_type = #tpu.core_type<tc>, window_params = [{transform_indices = @transform_0, window_bounds = array<i64: 8, 1>}, {transform_indices = @transform_1, window_bounds = array<i64: 8, 1>}, {}, {pipeline_mode = #tpu.pipeline_mode<synchronous>, transform_indices = @transform_3, window_bounds = array<i64: 128, 256>}, {pipeline_mode = #tpu.pipeline_mode<synchronous>, transform_indices = @transform_4, window_bounds = array<i64: 1, 256>}, {pipeline_mode = #tpu.pipeline_mode<synchronous>, transform_indices = @transform_5, window_bounds = array<i64: 1, 128>}, {pipeline_mode = #tpu.pipeline_mode<synchronous>, transform_indices = @transform_6, window_bounds = array<i64: 1, 128>}, {pipeline_mode = #tpu.pipeline_mode<synchronous>, transform_indices = @transform_7, window_bounds = array<i64: 128, 128>}, {pipeline_mode = #tpu.pipeline_mode<synchronous>, transform_indices = @transform_8, window_bounds = array<i64: 1, 128>}, {transform_indices = @transform_9, window_bounds = array<i64: 8, 128>}]} {
    %c2_i32 = arith.constant 2 : i32
    %0 = arith.remsi %arg0, %c2_i32 : i32
    %c0_i32 = arith.constant 0 : i32
    %1 = arith.cmpi eq, %arg0, %c0_i32 : i32
    %2 = arith.extui %1 : i1 to i32
    %c0_i32_0 = arith.constant 0 : i32
    %3 = arith.cmpi ne, %2, %c0_i32_0 : i32
    scf.if %3 {
      %c0_27 = arith.constant 0 : index
      %55 = memref.load %arg1[%c0_27] : memref<3xi32, #tpu.memory_space<smem>>
      %56 = tpu.assume_multiple %55, 16 : i32
      %c0_i32_28 = arith.constant 0 : i32
      %c0_i32_29 = arith.constant 0 : i32
      %c0_i32_30 = arith.constant 0 : i32
      %57 = tpu.memref_slice %arg4[%56, %c0_i32_30] : memref<144x128xbf16, #tpu.memory_space<any>> -> memref<48x128xbf16, #tpu.memory_space<any>>
      %c0_i32_31 = arith.constant 0 : i32
      %c0_i32_32 = arith.constant 0 : i32
      %58 = tpu.memref_slice %arg12[%c0_i32_28, %c0_i32_31, %c0_i32_32] : memref<2x48x128xbf16, #tpu.memory_space<vmem>> -> memref<1x48x128xbf16, #tpu.memory_space<vmem>>
      %59 = tpu.memref_squeeze %58 : memref<1x48x128xbf16, #tpu.memory_space<vmem>> -> memref<48x128xbf16, #tpu.memory_space<vmem>>
      %60 = tpu.memref_slice %arg13[%c0_i32_29] : memref<2x!tpu.dma_semaphore, #tpu.memory_space<semaphore_mem>> -> memref<1x!tpu.dma_semaphore, #tpu.memory_space<semaphore_mem>>
      %61 = tpu.memref_squeeze %60 : memref<1x!tpu.dma_semaphore, #tpu.memory_space<semaphore_mem>> -> memref<!tpu.dma_semaphore, #tpu.memory_space<semaphore_mem>>
      tpu.enqueue_dma source(%57 : memref<48x128xbf16, #tpu.memory_space<any>>) target(%59 : memref<48x128xbf16, #tpu.memory_space<vmem>>) target_semaphore(%61 : memref<!tpu.dma_semaphore, #tpu.memory_space<semaphore_mem>>)
    } else {
    }
    %c1_i32 = arith.constant 1 : i32
    %4 = arith.addi %arg0, %c1_i32 : i32
    %c3_i32 = arith.constant 3 : i32
    %5 = arith.cmpi slt, %4, %c3_i32 : i32
    %6 = arith.extui %5 : i1 to i32
    %c0_i32_1 = arith.constant 0 : i32
    %7 = arith.cmpi ne, %6, %c0_i32_1 : i32
    scf.if %7 {
      %c1_i32_27 = arith.constant 1 : i32
      %55 = arith.addi %arg0, %c1_i32_27 : i32
      %c1_i32_28 = arith.constant 1 : i32
      %56 = arith.subi %c1_i32_28, %0 : i32
      %57 = arith.index_cast %55 : i32 to index
      %58 = memref.load %arg1[%57] : memref<3xi32, #tpu.memory_space<smem>>
      %59 = tpu.assume_multiple %58, 16 : i32
      %c0_i32_29 = arith.constant 0 : i32
      %60 = tpu.memref_slice %arg4[%59, %c0_i32_29] : memref<144x128xbf16, #tpu.memory_space<any>> -> memref<48x128xbf16, #tpu.memory_space<any>>
      %c0_i32_30 = arith.constant 0 : i32
      %c0_i32_31 = arith.constant 0 : i32
      %61 = tpu.memref_slice %arg12[%56, %c0_i32_30, %c0_i32_31] : memref<2x48x128xbf16, #tpu.memory_space<vmem>> -> memref<1x48x128xbf16, #tpu.memory_space<vmem>>
      %62 = tpu.memref_squeeze %61 : memref<1x48x128xbf16, #tpu.memory_space<vmem>> -> memref<48x128xbf16, #tpu.memory_space<vmem>>
      %63 = tpu.memref_slice %arg13[%56] : memref<2x!tpu.dma_semaphore, #tpu.memory_space<semaphore_mem>> -> memref<1x!tpu.dma_semaphore, #tpu.memory_space<semaphore_mem>>
      %64 = tpu.memref_squeeze %63 : memref<1x!tpu.dma_semaphore, #tpu.memory_space<semaphore_mem>> -> memref<!tpu.dma_semaphore, #tpu.memory_space<semaphore_mem>>
      tpu.enqueue_dma source(%60 : memref<48x128xbf16, #tpu.memory_space<any>>) target(%62 : memref<48x128xbf16, #tpu.memory_space<vmem>>) target_semaphore(%64 : memref<!tpu.dma_semaphore, #tpu.memory_space<semaphore_mem>>)
    } else {
    }
    %8 = arith.index_cast %arg0 : i32 to index
    %9 = memref.load %arg1[%8] : memref<3xi32, #tpu.memory_space<smem>>
    %10 = tpu.assume_multiple %9, 16 : i32
    %c0_i32_2 = arith.constant 0 : i32
    %11 = tpu.memref_slice %arg4[%10, %c0_i32_2] : memref<144x128xbf16, #tpu.memory_space<any>> -> memref<48x128xbf16, #tpu.memory_space<any>>
    %c0_i32_3 = arith.constant 0 : i32
    %c0_i32_4 = arith.constant 0 : i32
    %12 = tpu.memref_slice %arg12[%0, %c0_i32_3, %c0_i32_4] : memref<2x48x128xbf16, #tpu.memory_space<vmem>> -> memref<1x48x128xbf16, #tpu.memory_space<vmem>>
    %13 = tpu.memref_squeeze %12 : memref<1x48x128xbf16, #tpu.memory_space<vmem>> -> memref<48x128xbf16, #tpu.memory_space<vmem>>
    %14 = tpu.memref_slice %arg13[%0] : memref<2x!tpu.dma_semaphore, #tpu.memory_space<semaphore_mem>> -> memref<1x!tpu.dma_semaphore, #tpu.memory_space<semaphore_mem>>
    %15 = tpu.memref_squeeze %14 : memref<1x!tpu.dma_semaphore, #tpu.memory_space<semaphore_mem>> -> memref<!tpu.dma_semaphore, #tpu.memory_space<semaphore_mem>>
    tpu.wait_dma2 semaphore(%15 : memref<!tpu.dma_semaphore, #tpu.memory_space<semaphore_mem>>) src(%11 : memref<48x128xbf16, #tpu.memory_space<any>>) dst(%13 : memref<48x128xbf16, #tpu.memory_space<vmem>>)
    %16 = arith.index_cast %0 : i32 to index
    %c0 = arith.constant 0 : index
    %c0_5 = arith.constant 0 : index
    %17 = vector.load %arg12[%16, %c0, %c0_5] : memref<2x48x128xbf16, #tpu.memory_space<vmem>>, vector<1x48x128xbf16>
    %18 = vector.shape_cast %17 : vector<1x48x128xbf16> to vector<48x128xbf16>
    %c0_6 = arith.constant 0 : index
    %c0_7 = arith.constant 0 : index
    %19 = vector.load %arg5[%c0_6, %c0_7] : memref<128x256xbf16, #tpu.memory_space<vmem>>, vector<128x256xbf16>
    %cst = arith.constant dense<0.000000e+00> : vector<48x256xf32>
    %20 = tpu.matmul %18, %19, %cst {dimension_numbers = #tpu.dot_dimension_numbers<[1], [0], [0], [1], [0, 0, 1, 1], [], []>} : vector<48x128xbf16>, vector<128x256xbf16>, vector<48x256xf32> -> vector<48x256xf32>
    %c0_8 = arith.constant 0 : index
    %c0_9 = arith.constant 0 : index
    %21 = vector.load %arg6[%c0_8, %c0_9] : memref<1x256xf32, #tpu.memory_space<vmem>>, vector<1x256xf32>
    %22 = vector.broadcast %21 : vector<1x256xf32> to vector<48x256xf32>
    %23 = arith.addf %20, %22 : vector<48x256xf32>
    %24 = vector.extract_strided_slice %23 {offsets = [0, 0], sizes = [48, 128], strides = [1, 1]} : vector<48x256xf32> to vector<48x128xf32>
    %25 = vector.extract_strided_slice %23 {offsets = [0, 128], sizes = [48, 128], strides = [1, 1]} : vector<48x256xf32> to vector<48x128xf32>
    %26 = arith.negf %25 : vector<48x128xf32>
    %27 = math.exp %26 : vector<48x128xf32>
    %cst_10 = arith.constant 1.000000e+00 : f32
    %28 = vector.broadcast %cst_10 : f32 to vector<48x128xf32>
    %29 = arith.addf %28, %27 : vector<48x128xf32>
    %30 = arith.divf %28, %29 : vector<48x128xf32>
    %31 = arith.mulf %24, %30 : vector<48x128xf32>
    %32 = tpu.iota {dimensions = array<i32: 1>} : vector<8x48xi32>
    %c0_11 = arith.constant 0 : index
    %c0_12 = arith.constant 0 : index
    %33 = vector.load %arg2[%c0_11, %c0_12] : memref<8x1xi32, #tpu.memory_space<vmem>>, vector<8x1xi32>
    %34 = vector.broadcast %33 : vector<8x1xi32> to vector<8x48xi32>
    %35 = arith.cmpi sge, %32, %34 : vector<8x48xi32>
    %c0_13 = arith.constant 0 : index
    %c0_14 = arith.constant 0 : index
    %36 = vector.load %arg3[%c0_13, %c0_14] : memref<8x1xi32, #tpu.memory_space<vmem>>, vector<8x1xi32>
    %37 = vector.broadcast %36 : vector<8x1xi32> to vector<8x48xi32>
    %38 = arith.cmpi slt, %32, %37 : vector<8x48xi32>
    %39 = arith.andi %35, %38 : vector<8x48xi1>
    %40 = arith.extui %39 : vector<8x48xi1> to vector<8x48xi32>
    %41 = arith.sitofp %40 : vector<8x48xi32> to vector<8x48xf32>
    %cst_15 = arith.constant dense<0.000000e+00> : vector<8x128xf32>
    %42 = tpu.matmul %41, %31, %cst_15 {dimension_numbers = #tpu.dot_dimension_numbers<[1], [0], [0], [1], [0, 0, 1, 1], [], []>} : vector<8x48xf32>, vector<48x128xf32>, vector<8x128xf32> -> vector<8x128xf32>
    %c0_16 = arith.constant 0 : index
    %c0_17 = arith.constant 0 : index
    %43 = vector.load %arg7[%c0_16, %c0_17] : memref<1x128xf32, #tpu.memory_space<vmem>>, vector<1x128xf32>
    %44 = vector.broadcast %43 : vector<1x128xf32> to vector<8x128xf32>
    %45 = arith.mulf %42, %44 : vector<8x128xf32>
    %c0_18 = arith.constant 0 : index
    %c0_19 = arith.constant 0 : index
    %46 = vector.load %arg8[%c0_18, %c0_19] : memref<1x128xf32, #tpu.memory_space<vmem>>, vector<1x128xf32>
    %47 = vector.broadcast %46 : vector<1x128xf32> to vector<8x128xf32>
    %48 = arith.addf %45, %47 : vector<8x128xf32>
    %c0_20 = arith.constant 0 : index
    %c0_21 = arith.constant 0 : index
    %49 = vector.load %arg9[%c0_20, %c0_21] : memref<128x128xf32, #tpu.memory_space<vmem>>, vector<128x128xf32>
    %cst_22 = arith.constant dense<0.000000e+00> : vector<8x128xf32>
    %50 = tpu.matmul %48, %49, %cst_22 {dimension_numbers = #tpu.dot_dimension_numbers<[1], [0], [0], [1], [0, 0, 1, 1], [], []>} : vector<8x128xf32>, vector<128x128xf32>, vector<8x128xf32> -> vector<8x128xf32>
    %c0_23 = arith.constant 0 : index
    %c0_24 = arith.constant 0 : index
    %51 = vector.load %arg10[%c0_23, %c0_24] : memref<1x128xf32, #tpu.memory_space<vmem>>, vector<1x128xf32>
    %52 = vector.broadcast %51 : vector<1x128xf32> to vector<8x128xf32>
    %53 = arith.addf %50, %52 : vector<8x128xf32>
    %c0_25 = arith.constant 0 : index
    %c0_26 = arith.constant 0 : index
    %54 = vector.load %arg11[%c0_25, %c0_26] : memref<8x128xf32, #tpu.memory_space<vmem>>, vector<8x128xf32>
    tpu.vector_store %arg11[%c0_25, %c0_26], %53 {strides = array<i32>} : memref<8x128xf32, #tpu.memory_space<vmem>>, vector<8x128xf32>,
    return
  }
  func.func @transform_0(%arg0: i32, %arg1: memref<3xi32, #tpu.memory_space<smem>>) -> (i32, i32) {
    %c0_i32 = arith.constant 0 : i32
    %c0_i32_0 = arith.constant 0 : i32
    return %arg0, %c0_i32 : i32, i32
  }
  func.func @transform_1(%arg0: i32, %arg1: memref<3xi32, #tpu.memory_space<smem>>) -> (i32, i32) {
    %c0_i32 = arith.constant 0 : i32
    %c0_i32_0 = arith.constant 0 : i32
    return %arg0, %c0_i32 : i32, i32
  }
  func.func @transform_3(%arg0: i32, %arg1: memref<3xi32, #tpu.memory_space<smem>>) -> (i32, i32) {
    %c0_i32 = arith.constant 0 : i32
    %c0_i32_0 = arith.constant 0 : i32
    %c0_i32_1 = arith.constant 0 : i32
    return %c0_i32, %c0_i32_0 : i32, i32
  }
  func.func @transform_4(%arg0: i32, %arg1: memref<3xi32, #tpu.memory_space<smem>>) -> (i32, i32) {
    %c0_i32 = arith.constant 0 : i32
    %c0_i32_0 = arith.constant 0 : i32
    %c0_i32_1 = arith.constant 0 : i32
    return %c0_i32, %c0_i32_0 : i32, i32
  }
  func.func @transform_5(%arg0: i32, %arg1: memref<3xi32, #tpu.memory_space<smem>>) -> (i32, i32) {
    %c0_i32 = arith.constant 0 : i32
    %c0_i32_0 = arith.constant 0 : i32
    %c0_i32_1 = arith.constant 0 : i32
    return %c0_i32, %c0_i32_0 : i32, i32
  }
  func.func @transform_6(%arg0: i32, %arg1: memref<3xi32, #tpu.memory_space<smem>>) -> (i32, i32) {
    %c0_i32 = arith.constant 0 : i32
    %c0_i32_0 = arith.constant 0 : i32
    %c0_i32_1 = arith.constant 0 : i32
    return %c0_i32, %c0_i32_0 : i32, i32
  }
  func.func @transform_7(%arg0: i32, %arg1: memref<3xi32, #tpu.memory_space<smem>>) -> (i32, i32) {
    %c0_i32 = arith.constant 0 : i32
    %c0_i32_0 = arith.constant 0 : i32
    %c0_i32_1 = arith.constant 0 : i32
    return %c0_i32, %c0_i32_0 : i32, i32
  }
  func.func @transform_8(%arg0: i32, %arg1: memref<3xi32, #tpu.memory_space<smem>>) -> (i32, i32) {
    %c0_i32 = arith.constant 0 : i32
    %c0_i32_0 = arith.constant 0 : i32
    %c0_i32_1 = arith.constant 0 : i32
    return %c0_i32, %c0_i32_0 : i32, i32
  }
  func.func @transform_9(%arg0: i32, %arg1: memref<3xi32, #tpu.memory_space<smem>>) -> (i32, i32) {
    %c0_i32 = arith.constant 0 : i32
    %c0_i32_0 = arith.constant 0 : i32
    return %arg0, %c0_i32 : i32, i32
  }
}

</mosaic_0001>

<llo_original>
// kernel: tpu_custom_call.1
$region0: #{tpu_custom_call.1}
  #allocation0 [shape = 'u32[]', space=smem, size = 0x4, offset = 0x4, fixed_abs, tag = 'smem constant byte address 0x4 - core index']
  #allocation1 [shape = 'u32[144,128]{1,0:T(1,128)}', space=vmem, size = 0x12000, scoped, tag = 'internal scratch']
  #allocation2 [shape = 'bf16[2,48,128]{2,1,0:T(8,128)(2,1)}', space=vmem, size = 0x6000, scoped, tag = 'scratch operand']
  #allocation3 [shape = 's32[2]{0}', space=sflag, size = 0x8, scoped, tag = 'scratch operand']
  #allocation4 [shape = 's32[1]{0}', space=sflag, size = 0x4, scoped, tag = 'scoped memory for tpu_custom_call.1']
  #allocation5 [shape = 'u8[512]{0}', space=smem, size = 0x200, scoped, tag = 'prefetched SMEM operand 0']
  #allocation12 [shape = 's32[]', space=sflag, size = 0x4, offset = 0, fixed_abs, tag = 'sflag constant byte address 0x0 - dummy sync flag']
  #allocation13 [shape = 's32[]', space=sflag, size = 0x4, offset = 0, fixed_abs, tag = 'sflag constant byte address 0x0 - dummy sync flag']
  #allocation14 [shape = 'u32[]', space=smem, size = 0x4, offset = 0x44, fixed_abs, tag = 'smem constant byte address 0x44 - assertion arg 0']
  #allocation15 [shape = 'u32[]', space=smem, size = 0x4, offset = 0x48, fixed_abs, tag = 'smem constant byte address 0x48 - assertion arg 1']
  #allocation16 [shape = 's32[]', space=sflag, size = 0x4, offset = 0, fixed_abs, tag = 'sflag constant byte address 0x0 - dummy sync flag']
  #allocation17 [shape = 's32[]', space=sflag, size = 0x4, offset = 0, fixed_abs, tag = 'sflag constant byte address 0x0 - dummy sync flag']
  %s0 = inlined_call_operand.vmem [shape: s32[3], index: 0, kind: input, shape index: {}]
  %s1 = inlined_call_operand.vmem [shape: s32[24,1], index: 1, kind: input, shape index: {}]
  %s2 = inlined_call_operand.vmem [shape: s32[24,1], index: 2, kind: input, shape index: {}]
  %s3 = inlined_call_operand.hbm [shape: bf16[144,128], index: 3, kind: input, shape index: {}]
  %s4 = inlined_call_operand.hbm [shape: bf16[128,256], index: 4, kind: input, shape index: {}]
  %s5 = inlined_call_operand.vmem [shape: f32[1,256], index: 5, kind: input, shape index: {}]
  %s6 = inlined_call_operand.vmem [shape: f32[1,128], index: 6, kind: input, shape index: {}]
  %s7 = inlined_call_operand.vmem [shape: f32[1,128], index: 7, kind: input, shape index: {}]
  %s8 = inlined_call_operand.hbm [shape: f32[128,128], index: 8, kind: input, shape index: {}]
  %s9 = inlined_call_operand.vmem [shape: f32[1,128], index: 9, kind: input, shape index: {}]
  %s10 = inlined_call_operand.hbm [shape: f32[24,128], index: 10, kind: output, shape index: {}]
  %s11 = sld [smem:[#allocation0]]
  $region89: #{tpu_custom_call.1} parent=0
    _
  %s13 = ssub.s32 1, %s11
  %s14 = scalar_select 0, %s13, %s11
  %s15 = sshll.u32 %s0, 4
  %s16 = int_to_ptr.vmem [resolvable:$true] %s15
  %18 = dma.vmem_to_smem %s16, 16, [#allocation5], [#allocation4]
  %19 = dma.done [#allocation4], 16
  %20 = sfence
  $region1: #{tpu_custom_call.1} parent=0
    #allocation6 [shape = 'u8[65536]{0}', space=vmem, size = 0x10000, scoped, tag = 'input window, operand 4, single buffered']
    #allocation7 [shape = 's32[2]{0}', space=sflag, size = 0x8, scoped, tag = 'scoped memory for tpu_custom_call.1']
    #allocation8 [shape = 's32[2]{0}', space=sflag, size = 0x8, scoped, tag = 'scoped memory for tpu_custom_call.1']
    #allocation9 [shape = 'u8[65536]{0}', space=vmem, size = 0x10000, scoped, tag = 'input window, operand 8, single buffered']
    #allocation10 [shape = 's32[1]{0}', space=sflag, size = 0x4, scoped, tag = 'scoped memory for tpu_custom_call.1']
    #allocation11 [shape = 'u8[8192]{0}', space=vmem, size = 0x2000, scoped, tag = 'output window, operand 0']
    %21 = vsyncpa [#allocation7], 0
    %22 = vsyncpa [#allocation10], 0
    %23 = vsyncpa [#allocation8], 0
    %s24 = scalar_lea.sflag [#allocation8], 1
    %25 = vsyncpa %s24, 0
    loop: start=0, step=1, limit=5
    $region2: #{tpu_custom_call.1} parent=1 // loop_pre_header
      _
    $region3: #{tpu_custom_call.1} parent=1 // loop_header
      %s27 = sphi 0, %s31
      %p28 = scmp.ge.s32.totalorder %s27, 5
      %s37 = sphi 0, %s39
      %s40 = sphi 0, %s37
      %s41 = sphi 0, %s40
      %s57 = sphi 0, %s41
      %s63 = sphi 0, %s65
      %s66 = sphi 0, %s63
      %s67 = sphi 0, %s66
      %s83 = sphi 0, %s67
      %s87 = sphi 0, %s87
      %s89 = sphi 0, %s87
      %s90 = sphi 0, %s89
      %s104 = sphi 0, %s90
      %s108 = sphi 0, %s108
      %s110 = sphi 0, %s108
      %s111 = sphi 0, %s110
      %s125 = sphi 0, %s111
      %s129 = sphi 0, %s129
      %s131 = sphi 0, %s129
      %s132 = sphi 0, %s131
      %s146 = sphi 0, %s132
      %s150 = sphi 0, %s150
      %s152 = sphi 0, %s150
      %s153 = sphi 0, %s152
      %s167 = sphi 0, %s153
      %s171 = sphi 0, %s171
      %s173 = sphi 0, %s171
      %s174 = sphi 0, %s173
      %s188 = sphi 0, %s174
      %s192 = sphi 0, %s192
      %s194 = sphi 0, %s192
      %s195 = sphi 0, %s194
      %s209 = sphi 0, %s195
      %s215 = sphi 0, %s217
      %s218 = sphi 0, %s215
      %s219 = sphi 0, %s218
      %s235 = sphi 0, %s219
    $region4: #{tpu_custom_call.1} parent=1 // loop_header_branch
      %30 = sbr.rel (%p28) target = $region8
    $region5: #{tpu_custom_call.1} parent=1 // loop_body
      %s32 = ssub.s32 %s27, 1
      %s33 = ssub.s32 %s27, 2
      %s34 = sadd.s32 %s27, 1
      %s35 = ssub.s32 %s27, %s34
      %p36 = scmp.eq.s32.totalorder %s35, 0
      %s38 = sadd.s32 %s37, 1
      %s39 = scalar_select %p36, %s37, %s38
      %p42 = pneg %p36
      %p43 = scmp.eq.s32.totalorder %s27, 2
      %p44 = por %p42, %p43
      %p45 = scmp.ne.s32.totalorder %s37, %s40
      %p46 = scmp.eq.s32.totalorder %s27, 0
      %p47 = por %p45, %p46
      %p48 = scmp.ne.s32.totalorder %s37, %s40
      %p49 = scmp.eq.s32.totalorder %s32, 2
      %p50 = por %p48, %p49
      %p51 = scmp.ne.s32.totalorder %s40, %s41
      %p52 = scmp.eq.s32.totalorder %s32, 0
      %p53 = por %p51, %p52
      %p54 = scmp.ne.s32.totalorder %s40, %s41
      %p55 = scmp.eq.s32.totalorder %s33, 2
      %p56 = por %p54, %p55
      %p58 = scmp.ne.s32.totalorder %s41, %s57
      %p59 = scmp.eq.s32.totalorder %s33, 0
      %p60 = por %p58, %p59
      %s61 = ssub.s32 %s27, %s34
      %p62 = scmp.eq.s32.totalorder %s61, 0
      %s64 = sadd.s32 %s63, 1
      %s65 = scalar_select %p62, %s63, %s64
      %p68 = pneg %p62
      %p69 = scmp.eq.s32.totalorder %s27, 2
      %p70 = por %p68, %p69
      %p71 = scmp.ne.s32.totalorder %s63, %s66
      %p72 = scmp.eq.s32.totalorder %s27, 0
      %p73 = por %p71, %p72
      %p74 = scmp.ne.s32.totalorder %s63, %s66
      %p75 = scmp.eq.s32.totalorder %s32, 2
      %p76 = por %p74, %p75
      %p77 = scmp.ne.s32.totalorder %s66, %s67
      %p78 = scmp.eq.s32.totalorder %s32, 0
      %p79 = por %p77, %p78
      %p80 = scmp.ne.s32.totalorder %s66, %s67
      %p81 = scmp.eq.s32.totalorder %s33, 2
      %p82 = por %p80, %p81
      %p84 = scmp.ne.s32.totalorder %s67, %s83
      %p85 = scmp.eq.s32.totalorder %s33, 0
      %p86 = por %p84, %p85
      %s88 = sadd.s32 %s87, 1
      %p91 = scmp.eq.s32.totalorder %s27, 2
      %p92 = scmp.ne.s32.totalorder %s87, %s89
      %p93 = scmp.eq.s32.totalorder %s27, 0
      %p94 = por %p92, %p93
      %p95 = scmp.ne.s32.totalorder %s87, %s89
      %p96 = scmp.eq.s32.totalorder %s32, 2
      %p97 = por %p95, %p96
      %p98 = scmp.ne.s32.totalorder %s89, %s90
      %p99 = scmp.eq.s32.totalorder %s32, 0
      %p100 = por %p98, %p99
      %p101 = scmp.ne.s32.totalorder %s89, %s90
      %p102 = scmp.eq.s32.totalorder %s33, 2
      %p103 = por %p101, %p102
      %p105 = scmp.ne.s32.totalorder %s90, %s104
      %p106 = scmp.eq.s32.totalorder %s33, 0
      %p107 = por %p105, %p106
      %s109 = sadd.s32 %s108, 1
      %p112 = scmp.eq.s32.totalorder %s27, 2
      %p113 = scmp.ne.s32.totalorder %s108, %s110
      %p114 = scmp.eq.s32.totalorder %s27, 0
      %p115 = por %p113, %p114
      %p116 = scmp.ne.s32.totalorder %s108, %s110
      %p117 = scmp.eq.s32.totalorder %s32, 2
      %p118 = por %p116, %p117
      %p119 = scmp.ne.s32.totalorder %s110, %s111
      %p120 = scmp.eq.s32.totalorder %s32, 0
      %p121 = por %p119, %p120
      %p122 = scmp.ne.s32.totalorder %s110, %s111
      %p123 = scmp.eq.s32.totalorder %s33, 2
      %p124 = por %p122, %p123
      %p126 = scmp.ne.s32.totalorder %s111, %s125
      %p127 = scmp.eq.s32.totalorder %s33, 0
      %p128 = por %p126, %p127
      %s130 = sadd.s32 %s129, 1
      %p133 = scmp.eq.s32.totalorder %s27, 2
      %p134 = scmp.ne.s32.totalorder %s129, %s131
      %p135 = scmp.eq.s32.totalorder %s27, 0
      %p136 = por %p134, %p135
      %p137 = scmp.ne.s32.totalorder %s129, %s131
      %p138 = scmp.eq.s32.totalorder %s32, 2
      %p139 = por %p137, %p138
      %p140 = scmp.ne.s32.totalorder %s131, %s132
      %p141 = scmp.eq.s32.totalorder %s32, 0
      %p142 = por %p140, %p141
      %p143 = scmp.ne.s32.totalorder %s131, %s132
      %p144 = scmp.eq.s32.totalorder %s33, 2
      %p145 = por %p143, %p144
      %p147 = scmp.ne.s32.totalorder %s132, %s146
      %p148 = scmp.eq.s32.totalorder %s33, 0
      %p149 = por %p147, %p148
      %s151 = sadd.s32 %s150, 1
      %p154 = scmp.eq.s32.totalorder %s27, 2
      %p155 = scmp.ne.s32.totalorder %s150, %s152
      %p156 = scmp.eq.s32.totalorder %s27, 0
      %p157 = por %p155, %p156
      %p158 = scmp.ne.s32.totalorder %s150, %s152
      %p159 = scmp.eq.s32.totalorder %s32, 2
      %p160 = por %p158, %p159
      %p161 = scmp.ne.s32.totalorder %s152, %s153
      %p162 = scmp.eq.s32.totalorder %s32, 0
      %p163 = por %p161, %p162
      %p164 = scmp.ne.s32.totalorder %s152, %s153
      %p165 = scmp.eq.s32.totalorder %s33, 2
      %p166 = por %p164, %p165
      %p168 = scmp.ne.s32.totalorder %s153, %s167
      %p169 = scmp.eq.s32.totalorder %s33, 0
      %p170 = por %p168, %p169
      %s172 = sadd.s32 %s171, 1
      %p175 = scmp.eq.s32.totalorder %s27, 2
      %p176 = scmp.ne.s32.totalorder %s171, %s173
      %p177 = scmp.eq.s32.totalorder %s27, 0
      %p178 = por %p176, %p177
      %p179 = scmp.ne.s32.totalorder %s171, %s173
      %p180 = scmp.eq.s32.totalorder %s32, 2
      %p181 = por %p179, %p180
      %p182 = scmp.ne.s32.totalorder %s173, %s174
      %p183 = scmp.eq.s32.totalorder %s32, 0
      %p184 = por %p182, %p183
      %p185 = scmp.ne.s32.totalorder %s173, %s174
      %p186 = scmp.eq.s32.totalorder %s33, 2
      %p187 = por %p185, %p186
      %p189 = scmp.ne.s32.totalorder %s174, %s188
      %p190 = scmp.eq.s32.totalorder %s33, 0
      %p191 = por %p189, %p190
      %s193 = sadd.s32 %s192, 1
      %p196 = scmp.eq.s32.totalorder %s27, 2
      %p197 = scmp.ne.s32.totalorder %s192, %s194
      %p198 = scmp.eq.s32.totalorder %s27, 0
      %p199 = por %p197, %p198
      %p200 = scmp.ne.s32.totalorder %s192, %s194
      %p201 = scmp.eq.s32.totalorder %s32, 2
      %p202 = por %p200, %p201
      %p203 = scmp.ne.s32.totalorder %s194, %s195
      %p204 = scmp.eq.s32.totalorder %s32, 0
      %p205 = por %p203, %p204
      %p206 = scmp.ne.s32.totalorder %s194, %s195
      %p207 = scmp.eq.s32.totalorder %s33, 2
      %p208 = por %p206, %p207
      %p210 = scmp.ne.s32.totalorder %s195, %s209
      %p211 = scmp.eq.s32.totalorder %s33, 0
      %p212 = por %p210, %p211
      %s213 = ssub.s32 %s27, %s34
      %p214 = scmp.eq.s32.totalorder %s213, 0
      %s216 = sadd.s32 %s215, 1
      %s217 = scalar_select %p214, %s215, %s216
      %p220 = pneg %p214
      %p221 = scmp.eq.s32.totalorder %s27, 2
      %p222 = por %p220, %p221
      %p223 = scmp.ne.s32.totalorder %s215, %s218
      %p224 = scmp.eq.s32.totalorder %s27, 0
      %p225 = por %p223, %p224
      %p226 = scmp.ne.s32.totalorder %s215, %s218
      %p227 = scmp.eq.s32.totalorder %s32, 2
      %p228 = por %p226, %p227
      %p229 = scmp.ne.s32.totalorder %s218, %s219
      %p230 = scmp.eq.s32.totalorder %s32, 0
      %p231 = por %p229, %p230
      %p232 = scmp.ne.s32.totalorder %s218, %s219
      %p233 = scmp.eq.s32.totalorder %s33, 2
      %p234 = por %p232, %p233
      %p236 = scmp.ne.s32.totalorder %s219, %s235
      %p237 = scmp.eq.s32.totalorder %s33, 0
      %p238 = por %p236, %p237
      %p239 = scmp.le.s32.totalorder 1, %s27
      %p240 = scmp.lt.s32.totalorder %s27, 4
      %p241 = pnand %p239, %p240
      %p242 = pneg %p241
      // Predicated region
      $region9: #{tpu_custom_call.1} parent=5 // pred_check
        _
      $region10: #{tpu_custom_call.1} parent=5 // pred_check_branch
        %244 = sbr.rel (%p241) target = $region12
      $region11: #{tpu_custom_call.1} parent=5 // pred_region
        %s245 = ssub.s32 %s27, 1
        // Predicated region
        $region13: #{tpu_custom_call.1} parent=11 // pred_check
          %p246 = pneg %p100
        $region14: #{tpu_custom_call.1} parent=11 // pred_check_branch
          %248 = sbr.rel (%p246) target = $region16
        $region15: #{tpu_custom_call.1} parent=11 // pred_region
          %s250 = ssub.s32 2048, 2048
          %251 = vsyncadd [#allocation7], %s250
          %s252 = sshll.u32 [#allocation6], 4
          %s253 = int_to_ptr.vmem [resolvable:$true] %s252
          %258 = dma.hbm_to_vmem [thread:$0]  %s4, 2048, %s253, [#allocation7], 128, 128, 8
        $region16: #{tpu_custom_call.1} parent=11 // pred_fallthru
          _
        // Predicated region
        $region17: #{tpu_custom_call.1} parent=11 // pred_check
          %p259 = pneg %p121
        $region18: #{tpu_custom_call.1} parent=11 // pred_check_branch
          %261 = sbr.rel (%p259) target = $region20
        $region19: #{tpu_custom_call.1} parent=11 // pred_region
          _
        $region20: #{tpu_custom_call.1} parent=11 // pred_fallthru
          _
        // Predicated region
        $region21: #{tpu_custom_call.1} parent=11 // pred_check
          %p262 = pneg %p142
        $region22: #{tpu_custom_call.1} parent=11 // pred_check_branch
          %264 = sbr.rel (%p262) target = $region24
        $region23: #{tpu_custom_call.1} parent=11 // pred_region
          _
        $region24: #{tpu_custom_call.1} parent=11 // pred_fallthru
          _
        // Predicated region
        $region25: #{tpu_custom_call.1} parent=11 // pred_check
          %p265 = pneg %p163
        $region26: #{tpu_custom_call.1} parent=11 // pred_check_branch
          %267 = sbr.rel (%p265) target = $region28
        $region27: #{tpu_custom_call.1} parent=11 // pred_region
          _
        $region28: #{tpu_custom_call.1} parent=11 // pred_fallthru
          _
        // Predicated region
        $region29: #{tpu_custom_call.1} parent=11 // pred_check
          %p268 = pneg %p184
        $region30: #{tpu_custom_call.1} parent=11 // pred_check_branch
          %270 = sbr.rel (%p268) target = $region32
        $region31: #{tpu_custom_call.1} parent=11 // pred_region
          %s272 = ssub.s32 2048, 2048
          %273 = vsyncadd [#allocation10], %s272
          %s274 = sshll.u32 [#allocation9], 4
          %s275 = int_to_ptr.vmem [resolvable:$true] %s274
          %280 = dma.hbm_to_vmem [thread:$0]  %s8, 2048, %s275, [#allocation10], 128, 128, 8
        $region32: #{tpu_custom_call.1} parent=11 // pred_fallthru
          _
        // Predicated region
        $region33: #{tpu_custom_call.1} parent=11 // pred_check
          %p281 = pneg %p205
        $region34: #{tpu_custom_call.1} parent=11 // pred_check_branch
          %283 = sbr.rel (%p281) target = $region36
        $region35: #{tpu_custom_call.1} parent=11 // pred_region
          _
        $region36: #{tpu_custom_call.1} parent=11 // pred_fallthru
          _
      $region12: #{tpu_custom_call.1} parent=5 // pred_fallthru
        _
      %p284 = scmp.lt.s32.totalorder %s27, 3
      // Predicated region
      $region37: #{tpu_custom_call.1} parent=5 // pred_check
        %p285 = pneg %p284
      $region38: #{tpu_custom_call.1} parent=5 // pred_check_branch
        %287 = sbr.rel (%p285) target = $region40
      $region39: #{tpu_custom_call.1} parent=5 // pred_region
        // Predicated region
        $region41: #{tpu_custom_call.1} parent=39 // pred_check
          %p288 = pneg %p47
        $region42: #{tpu_custom_call.1} parent=39 // pred_check_branch
          %290 = sbr.rel (%p288) target = $region44
        $region43: #{tpu_custom_call.1} parent=39 // pred_region
          %p291 = scmp.lt.s32.totalorder %s27, 2
          %s292 = scalar_select %p291, %s27, 2
          %s293 = smul.addr %s292, 8
          %s294 = scalar_lea.vmem %s1, %s293
        $region44: #{tpu_custom_call.1} parent=39 // pred_fallthru
          _
        // Predicated region
        $region45: #{tpu_custom_call.1} parent=39 // pred_check
          %p295 = pneg %p73
        $region46: #{tpu_custom_call.1} parent=39 // pred_check_branch
          %297 = sbr.rel (%p295) target = $region48
        $region47: #{tpu_custom_call.1} parent=39 // pred_region
          %p298 = scmp.lt.s32.totalorder %s27, 2
          %s299 = scalar_select %p298, %s27, 2
          %s300 = smul.addr %s299, 8
          %s301 = scalar_lea.vmem %s2, %s300
        $region48: #{tpu_custom_call.1} parent=39 // pred_fallthru
          _
      $region40: #{tpu_custom_call.1} parent=5 // pred_fallthru
        _
      %p302 = scmp.le.s32.totalorder 1, %s27
      %p303 = scmp.lt.s32.totalorder %s27, 4
      %p304 = pnand %p302, %p303
      %p305 = pneg %p304
      // Predicated region
      $region49: #{tpu_custom_call.1} parent=5 // pred_check
        _
      $region50: #{tpu_custom_call.1} parent=5 // pred_check_branch
        %307 = sbr.rel (%p304) target = $region52
      $region51: #{tpu_custom_call.1} parent=5 // pred_region
        %s308 = ssub.s32 %s27, 1
        // Predicated region
        $region53: #{tpu_custom_call.1} parent=51 // pred_check
          %p309 = pneg %p100
        $region54: #{tpu_custom_call.1} parent=51 // pred_check_branch
          %311 = sbr.rel (%p309) target = $region56
        $region55: #{tpu_custom_call.1} parent=51 // pred_region
          %312 = dma.done [#allocation7], 2048
        $region56: #{tpu_custom_call.1} parent=51 // pred_fallthru
          _
        // Predicated region
        $region57: #{tpu_custom_call.1} parent=51 // pred_check
          %p313 = pneg %p184
        $region58: #{tpu_custom_call.1} parent=51 // pred_check_branch
          %315 = sbr.rel (%p313) target = $region60
        $region59: #{tpu_custom_call.1} parent=51 // pred_region
          %316 = dma.done [#allocation10], 2048
        $region60: #{tpu_custom_call.1} parent=51 // pred_fallthru
          _
        %p317 = scmp.lt.s32.totalorder %s32, 2
        %s318 = scalar_select %p317, %s32, 2
        %s319 = smul.addr %s318, 8
        %s320 = scalar_lea.vmem %s1, %s319
        %p321 = pneg %p53
        %p322 = pneg %p50
        %p323 = scmp.lt.s32.totalorder %s32, 2
        %s324 = scalar_select %p323, %s32, 2
        %s325 = smul.addr %s324, 8
        %s326 = scalar_lea.vmem %s2, %s325
        %p327 = pneg %p79
        %p328 = pneg %p76
        %p329 = pneg %p100
        %p330 = pneg %p97
        %p331 = pneg %p121
        %p332 = pneg %p118
        %p333 = pneg %p142
        %p334 = pneg %p139
        %p335 = pneg %p163
        %p336 = pneg %p160
        %p337 = pneg %p184
        %p338 = pneg %p181
        %p339 = pneg %p205
        %p340 = pneg %p202
        %p341 = pneg %p231
        %p342 = pneg %p228
        %s343 = sand.u32 %s218, 1
        %s344 = scalar_lea.sflag [#allocation8], %s343
        %s345 = sand.u32 %s218, 1
        %s346 = smul.addr %s345, 8
        %s347 = scalar_lea.vmem [#allocation11], %s346
        %p348 = scmp.lt.s32.totalorder %s32, 2
        %s349 = scalar_select %p348, %s32, 2
        %s350 = smul.addr %s349, 8
        %s351 = scalar_lea.vmem %s1, %s350
        %p352 = scmp.lt.s32.totalorder %s32, 2
        %s353 = scalar_select %p352, %s32, 2
        %s354 = smul.addr %s353, 8
        %s355 = scalar_lea.vmem %s2, %s354
        %p357 = scmp.lt.s32.totalorder %s32, 0
        %s358 = ssub.s32 0, %s32
        %s359 = scalar_select %p357, %s358, %s32
        %s360 = sand.u32 %s359, 1
        %s361 = ssub.s32 0, %s360
        %s362 = scalar_select %p357, %s361, %s360
        %p363 = scmp.eq.s32.totalorder %s32, 0
        // Predicated region
        $region61: #{tpu_custom_call.1} parent=51 // pred_check
          %p364 = pneg %p363
        $region62: #{tpu_custom_call.1} parent=51 // pred_check_branch
          %366 = sbr.rel (%p364) target = $region64
        $region63: #{tpu_custom_call.1} parent=51 // pred_region
          %s367 = sld [smem:[#allocation5]]
          %s368 = sshra.s32 %s367, 3
          %s369 = sand.u32 %s367, 7
          %s370 = smul.addr %s368, 64
          %s371 = scalar_lea.hbm %s3, %s370
          // Predicated region
          $region65: #{tpu_custom_call.1} parent=63 // pred_check
            _
          $region66: #{tpu_custom_call.1} parent=63 // pred_check_branch
            %373 = sbr.rel target = $region68
          $region67: #{tpu_custom_call.1} parent=63 // pred_region
            %374 = sst [smem:[#allocation14]] [#allocation13]
            %375 = sst [smem:[#allocation15]] [#allocation12]
          $region68: #{tpu_custom_call.1} parent=63 // pred_fallthru
            _
          %377 = shalt.err (0)
          %s379 = sshll.u32 [#allocation2], 4
          %s380 = int_to_ptr.vmem [resolvable:$true] %s379
          %382 = dma.hbm_to_vmem [thread:$0]  %s371, 384, %s380, [#allocation3]
        $region64: #{tpu_custom_call.1} parent=51 // pred_fallthru
          _
        %s383 = sadd.s32 %s32, 1
        %p384 = scmp.lt.s32.totalorder %s383, 3
        // Predicated region
        $region69: #{tpu_custom_call.1} parent=51 // pred_check
          %p385 = pneg %p384
        $region70: #{tpu_custom_call.1} parent=51 // pred_check_branch
          %387 = sbr.rel (%p385) target = $region72
        $region71: #{tpu_custom_call.1} parent=51 // pred_region
          %s388 = ssub.s32 1, %s362
          %s389 = sld [smem:[#allocation5 + %s383]]
          %s390 = sshra.s32 %s389, 3
          %s391 = sand.u32 %s389, 7
          %s392 = smul.addr %s390, 64
          %s393 = scalar_lea.hbm %s3, %s392
          %s394 = smul.u32 %s388, 6
          %s395 = smul.addr %s394, 4
          %s396 = scalar_lea.vmem [#allocation2], %s395
          %s397 = scalar_lea.sflag [#allocation3], %s388
          // Predicated region
          $region73: #{tpu_custom_call.1} parent=71 // pred_check
            _
          $region74: #{tpu_custom_call.1} parent=71 // pred_check_branch
            %399 = sbr.rel target = $region76
          $region75: #{tpu_custom_call.1} parent=71 // pred_region
            %400 = sst [smem:[#allocation14]] [#allocation17]
            %401 = sst [smem:[#allocation15]] [#allocation16]
          $region76: #{tpu_custom_call.1} parent=71 // pred_fallthru
            _
          %403 = shalt.err (0)
          %s405 = sshll.u32 %s396, 4
          %s406 = int_to_ptr.vmem [resolvable:$true] %s405
          %408 = dma.hbm_to_vmem [thread:$0]  %s393, 384, %s406, %s397
        $region72: #{tpu_custom_call.1} parent=51 // pred_fallthru
          _
        %s409 = sld [smem:[#allocation5 + %s32]]
        %s410 = smul.u32 %s362, 6
        %s411 = smul.addr %s410, 4
        %s412 = scalar_lea.vmem [#allocation2], %s411
        %s413 = scalar_lea.sflag [#allocation3], %s362
        %s414 = smul.u32 4, 6
        %s415 = smul.u32 %s414, 1
        %s416 = sshll.u32 %s415, 4
        %417 = dma.done %s413, %s416
        %v418 = vld [vmem:[%s412] sm:$0xf]
        %v419 = vld [vmem:[%s412 + $0x4] sm:$0xf]
        %v420 = vld [vmem:[%s412 + $0x8] sm:$0xf]
        %v421 = vld [vmem:[%s412 + $0xc] sm:$0xf]
        %v422 = vld [vmem:[%s412 + $0x10] sm:$0xf]
        %v423 = vld [vmem:[%s412 + $0x14] sm:$0xf]
        %v424 = vld [vmem:[#allocation6] sm:$0xff]
        %v425 = vld [vmem:[#allocation6 + $0x8] sm:$0xff]
        %v426 = vld [vmem:[#allocation6 + $0x10] sm:$0xff]
        %v427 = vld [vmem:[#allocation6 + $0x18] sm:$0xff]
        %v428 = vld [vmem:[#allocation6 + $0x20] sm:$0xff]
        %v429 = vld [vmem:[#allocation6 + $0x28] sm:$0xff]
        %v430 = vld [vmem:[#allocation6 + $0x30] sm:$0xff]
        %v431 = vld [vmem:[#allocation6 + $0x38] sm:$0xff]
        %v432 = vld [vmem:[#allocation6 + $0x40] sm:$0xff]
        %v433 = vld [vmem:[#allocation6 + $0x48] sm:$0xff]
        %v434 = vld [vmem:[#allocation6 + $0x50] sm:$0xff]
        %v435 = vld [vmem:[#allocation6 + $0x58] sm:$0xff]
        %v436 = vld [vmem:[#allocation6 + $0x60] sm:$0xff]
        %v437 = vld [vmem:[#allocation6 + $0x68] sm:$0xff]
        %v438 = vld [vmem:[#allocation6 + $0x70] sm:$0xff]
        %v439 = vld [vmem:[#allocation6 + $0x78] sm:$0xff]
        %v440 = vld [vmem:[%s5] sm:$0x3]
        %v442 = vlaneseq
        %v443 = vshrl.u32 %v442, 7
        %v444 = vsub.s32 0, %v443
        %v445 = vrot.slane %v440, %v444
        %v446 = vlaneseq
        %v447 = vshrl.u32 %v446, 7
        %v448 = vsub.s32 1, %v447
        %v449 = vrot.slane %v440, %v448
        %v458 = vunpack.c.l.b16 %v418
        %v459 = vunpack.c.l.b16 %v419
        %v460 = vunpack.c.l.b16 %v420
        %v461 = vunpack.c.l.b16 %v421
        %v462 = vunpack.c.l.b16 %v422
        %v463 = vunpack.c.l.b16 %v423
        %v464 = vpack.c.b16 %v459, %v458
        %v465 = vpack.c.b16 %v461, %v460
        %v466 = vpack.c.b16 %v463, %v462
        %v486 = vunpack.c.l.b16 %v424
        %v487 = vunpack.c.h.b16 %v424
        %v488 = vunpack.c.l.b16 %v425
        %v489 = vunpack.c.h.b16 %v425
        %v490 = vunpack.c.l.b16 %v426
        %v491 = vunpack.c.h.b16 %v426
        %v492 = vunpack.c.l.b16 %v427
        %v493 = vunpack.c.h.b16 %v427
        %v494 = vunpack.c.l.b16 %v428
        %v495 = vunpack.c.h.b16 %v428
        %v496 = vunpack.c.l.b16 %v429
        %v497 = vunpack.c.h.b16 %v429
        %v498 = vunpack.c.l.b16 %v430
        %v499 = vunpack.c.h.b16 %v430
        %v500 = vunpack.c.l.b16 %v431
        %v501 = vunpack.c.h.b16 %v431
        %v502 = vunpack.c.l.b16 %v432
        %v503 = vunpack.c.h.b16 %v432
        %v504 = vunpack.c.l.b16 %v433
        %v505 = vunpack.c.h.b16 %v433
        %v506 = vunpack.c.l.b16 %v434
        %v507 = vunpack.c.h.b16 %v434
        %v508 = vunpack.c.l.b16 %v435
        %v509 = vunpack.c.h.b16 %v435
        %v510 = vunpack.c.l.b16 %v436
        %v511 = vunpack.c.h.b16 %v436
        %v512 = vunpack.c.l.b16 %v437
        %v513 = vunpack.c.h.b16 %v437
        %v514 = vunpack.c.l.b16 %v438
        %v515 = vunpack.c.h.b16 %v438
        %v516 = vunpack.c.l.b16 %v439
        %v517 = vunpack.c.h.b16 %v439
        %v518 = vpack.c.b16 %v488, %v486
        %v519 = vpack.c.b16 %v489, %v487
        %v520 = vpack.c.b16 %v492, %v490
        %v521 = vpack.c.b16 %v493, %v491
        %v522 = vpack.c.b16 %v496, %v494
        %v523 = vpack.c.b16 %v497, %v495
        %v524 = vpack.c.b16 %v500, %v498
        %v525 = vpack.c.b16 %v501, %v499
        %v526 = vpack.c.b16 %v504, %v502
        %v527 = vpack.c.b16 %v505, %v503
        %v528 = vpack.c.b16 %v508, %v506
        %v529 = vpack.c.b16 %v509, %v507
        %v530 = vpack.c.b16 %v512, %v510
        %v531 = vpack.c.b16 %v513, %v511
        %v532 = vpack.c.b16 %v516, %v514
        %v533 = vpack.c.b16 %v517, %v515
        %550 = vmatprep.subr.bf16.mxu0 %v533
        %551 = vmatpush1.bf16.msra.mxu0 %v532
        %552 = vmatprep.subr.bf16.mxu0 %v531
        %553 = vmatpush1.bf16.msra.mxu0 %v530
        %554 = vmatprep.subr.bf16.mxu0 %v529
        %555 = vmatpush1.bf16.msra.mxu0 %v528
        %556 = vmatprep.subr.bf16.mxu0 %v527
        %557 = vmatpush1.bf16.msra.mxu0 %v526
        %558 = vmatprep.subr.bf16.mxu0 %v525
        %559 = vmatpush1.bf16.msra.mxu0 %v524
        %560 = vmatprep.subr.bf16.mxu0 %v523
        %561 = vmatpush1.bf16.msra.mxu0 %v522
        %562 = vmatprep.subr.bf16.mxu0 %v521
        %563 = vmatpush1.bf16.msra.mxu0 %v520
        %564 = vmatprep.subr.bf16.mxu0 %v519
        %565 = vmatpush1.bf16.msra.mxu0 %v518
        %566 = vmatprep.subr.bf16.mxu0 0
        %567 = vmatpush2.bf16.msra.mxu0 0
        %568 = vmatprep.subr.bf16.mxu0 0
        %569 = vmatpush2.bf16.msra.mxu0 0
        %570 = vmatprep.subr.bf16.mxu0 0
        %571 = vmatpush2.bf16.msra.mxu0 0
        %572 = vmatprep.subr.bf16.mxu0 0
        %573 = vmatpush2.bf16.msra.mxu0 0
        %574 = vmatprep.subr.bf16.mxu0 0
        %575 = vmatpush2.bf16.msra.mxu0 0
        %576 = vmatprep.subr.bf16.mxu0 0
        %577 = vmatpush2.bf16.msra.mxu0 0
        %578 = vmatprep.subr.bf16.mxu0 0
        %579 = vmatpush2.bf16.msra.mxu0 0
        %580 = vmatprep.subr.bf16.mxu0 0
        %581 = vmatpush2.bf16.msra.mxu0 0
        %582 = vmatprep.mubr.bf16.mxu0 0
        %583 = vmatmul.mubr.bf16.gmra.mxu0 %v464
        %v584 = vpop.f32.mrf.mxu0
        %v585 = vadd.f32 %v445, %v584
        %v586 = vpop.f32.mrf.mxu0
        %v587 = vadd.f32 %v449, %v586
        %v588 = vpop.f32.mrf.mxu0
        %v589 = vadd.f32 %v445, %v588
        %v590 = vpop.f32.mrf.mxu0
        %v591 = vadd.f32 %v449, %v590
        %592 = vmatprep.mubr.bf16.mxu0 0
        %593 = vmatmul.mubr.bf16.gmra.mxu0 %v465
        %v594 = vpop.f32.mrf.mxu0
        %v595 = vadd.f32 %v445, %v594
        %v596 = vpop.f32.mrf.mxu0
        %v597 = vadd.f32 %v449, %v596
        %v598 = vpop.f32.mrf.mxu0
        %v599 = vadd.f32 %v445, %v598
        %v600 = vpop.f32.mrf.mxu0
        %v601 = vadd.f32 %v449, %v600
        %602 = vmatprep.mubr.bf16.mxu0 0
        %603 = vmatmul.mubr.bf16.gmra.mxu0 %v466
        %v604 = vpop.f32.mrf.mxu0
        %v605 = vadd.f32 %v445, %v604
        %v606 = vpop.f32.mrf.mxu0
        %v607 = vadd.f32 %v449, %v606
        %v608 = vpop.f32.mrf.mxu0
        %v609 = vadd.f32 %v445, %v608
        %v610 = vpop.f32.mrf.mxu0
        %v611 = vadd.f32 %v449, %v610
        %612 = vdwg.mxu0
        %v613 = vxor.u32 %v587, 2147483648
        %v614 = vxor.u32 %v591, 2147483648
        %v615 = vxor.u32 %v597, 2147483648
        %v616 = vxor.u32 %v601, 2147483648
        %v617 = vxor.u32 %v607, 2147483648
        %v618 = vxor.u32 %v611, 2147483648
        %v619 = vmul.f32 %v613, 1.442695
        %v620 = vpow.pop %v619
        %v621 = vmul.f32 %v614, 1.442695
        %v622 = vpow.pop %v621
        %v623 = vmul.f32 %v615, 1.442695
        %v624 = vpow.pop %v623
        %v625 = vmul.f32 %v616, 1.442695
        %v626 = vpow.pop %v625
        %v627 = vmul.f32 %v617, 1.442695
        %v628 = vpow.pop %v627
        %v629 = vmul.f32 %v618, 1.442695
        %v630 = vpow.pop %v629
        %v631 = vadd.f32 %v620, 1.0
        %v632 = vadd.f32 %v622, 1.0
        %v633 = vadd.f32 %v624, 1.0
        %v634 = vadd.f32 %v626, 1.0
        %v635 = vadd.f32 %v628, 1.0
        %v636 = vadd.f32 %v630, 1.0
        %v637 = vrcp.pop %v631
        %v638 = vmul.f32 1.0, %v637
        %v639 = vrcp.pop %v632
        %v640 = vmul.f32 1.0, %v639
        %v641 = vrcp.pop %v633
        %v642 = vmul.f32 1.0, %v641
        %v643 = vrcp.pop %v634
        %v644 = vmul.f32 1.0, %v643
        %v645 = vrcp.pop %v635
        %v646 = vmul.f32 1.0, %v645
        %v647 = vrcp.pop %v636
        %v648 = vmul.f32 1.0, %v647
        %v649 = vmul.f32 %v585, %v638
        %v650 = vmul.f32 %v589, %v640
        %v651 = vmul.f32 %v595, %v642
        %v652 = vmul.f32 %v599, %v644
        %v653 = vmul.f32 %v605, %v646
        %v654 = vmul.f32 %v609, %v648
        %v655 = vlaneseq
        %v656 = vand.u32 %v655, 127
        %v657 = vld [vmem:[%s351] sm:$0xff]
        %658 = vset.pattern.permute.xlu0 0
        %659 = vperm.xlu0 %658, %v657
        %v660 = vpop.permute.xlu0 %659
        %vm661 = vcmp.ge.s32.totalorder %v656, %v660
        %v662 = vld [vmem:[%s355] sm:$0xff]
        %663 = vset.pattern.permute.xlu0 0
        %664 = vperm.xlu0 %663, %v662
        %v665 = vpop.permute.xlu0 %664
        %vm666 = vcmp.lt.s32.totalorder %v656, %v665
        %vm667 = vmand %vm661, %vm666
        %v668 = vsel %vm667, 1, 0
        %v669 = vcvt.s32.f32 %v668
        %vm670 = vcmask 392192
        %v672 = vsel %vm670, %v669, 0
        %674 = vmatprep.subr.mxu0 0.0
        %675 = vmatpush1.msra.mxu0 0.0
        %676 = vmatprep.subr.mxu0 0.0
        %677 = vmatpush1.msra.mxu0 0.0
        %678 = vmatprep.subr.mxu0 0.0
        %679 = vmatpush1.msra.mxu0 0.0
        %680 = vmatprep.subr.mxu0 0.0
        %681 = vmatpush1.msra.mxu0 0.0
        %682 = vmatprep.subr.mxu0 0.0
        %683 = vmatpush1.msra.mxu0 0.0
        %684 = vmatprep.subr.mxu0 0.0
        %685 = vmatpush1.msra.mxu0 0.0
        %686 = vmatprep.subr.mxu0 0.0
        %687 = vmatpush1.msra.mxu0 0.0
        %688 = vmatprep.subr.mxu0 0.0
        %689 = vmatpush1.msra.mxu0 0.0
        %690 = vmatprep.subr.mxu0 0.0
        %691 = vmatpush1.msra.mxu0 0.0
        %692 = vmatprep.subr.mxu0 0.0
        %693 = vmatpush1.msra.mxu0 0.0
        %694 = vmatprep.subr.mxu0 0.0
        %695 = vmatpush1.msra.mxu0 %v654
        %696 = vmatprep.subr.mxu0 0.0
        %697 = vmatpush1.msra.mxu0 %v653
        %698 = vmatprep.subr.mxu0 0.0
        %699 = vmatpush1.msra.mxu0 %v652
        %700 = vmatprep.subr.mxu0 0.0
        %701 = vmatpush1.msra.mxu0 %v651
        %702 = vmatprep.subr.mxu0 0.0
        %703 = vmatpush1.msra.mxu0 %v650
        %704 = vmatprep.subr.mxu0 0.0
        %705 = vmatpush1.msra.mxu0 %v649
        %706 = vmatprep.subr.mxu0 0.0
        %707 = vmatpush2.msra.mxu0 0.0
        %708 = vmatprep.subr.mxu0 0.0
        %709 = vmatpush2.msra.mxu0 0.0
        %710 = vmatprep.subr.mxu0 0.0
        %711 = vmatpush2.msra.mxu0 0.0
        %712 = vmatprep.subr.mxu0 0.0
        %713 = vmatpush2.msra.mxu0 0.0
        %714 = vmatprep.subr.mxu0 0.0
        %715 = vmatpush2.msra.mxu0 0.0
        %716 = vmatprep.subr.mxu0 0.0
        %717 = vmatpush2.msra.mxu0 0.0
        %718 = vmatprep.subr.mxu0 0.0
        %719 = vmatpush2.msra.mxu0 0.0
        %720 = vmatprep.subr.mxu0 0.0
        %721 = vmatpush2.msra.mxu0 0.0
        %722 = vmatprep.subr.mxu0 0.0
        %723 = vmatpush2.msra.mxu0 0.0
        %724 = vmatprep.subr.mxu0 0.0
        %725 = vmatpush2.msra.mxu0 0.0
        %726 = vmatprep.subr.mxu0 0.0
        %727 = vmatpush2.msra.mxu0 0.0
        %728 = vmatprep.subr.mxu0 0.0
        %729 = vmatpush2.msra.mxu0 0.0
        %730 = vmatprep.subr.mxu0 0.0
        %731 = vmatpush2.msra.mxu0 0.0
        %732 = vmatprep.subr.mxu0 0.0
        %733 = vmatpush2.msra.mxu0 0.0
        %734 = vmatprep.subr.mxu0 0.0
        %735 = vmatpush2.msra.mxu0 0.0
        %736 = vmatprep.subr.mxu0 0.0
        %737 = vmatpush2.msra.mxu0 0.0
        %738 = vmatprep.mubr.f32.mxu0 0.0
        %739 = vmatmul.mubr.f32.gmra.mxu0 %v672
        %v740 = vpop.f32.mrf.mxu0
        %v741 = vadd.f32 0.0, %v740
        %v742 = vpop.f32.mrf.mxu0
        %743 = vdwg.mxu0
        %v744 = vld [vmem:[%s6] sm:$0x1]
        %v746 = vlaneseq
        %v747 = vshrl.u32 %v746, 7
        %v748 = vsub.s32 0, %v747
        %v749 = vrot.slane %v744, %v748
        %v751 = vmul.f32 %v741, %v749
        %v752 = vld [vmem:[%s7] sm:$0x1]
        %v754 = vlaneseq
        %v755 = vshrl.u32 %v754, 7
        %v756 = vsub.s32 0, %v755
        %v757 = vrot.slane %v752, %v756
        %v759 = vadd.f32 %v751, %v757
        %v760 = vld [vmem:[#allocation9] sm:$0xff]
        %v761 = vld [vmem:[#allocation9 + $0x8] sm:$0xff]
        %v762 = vld [vmem:[#allocation9 + $0x10] sm:$0xff]
        %v763 = vld [vmem:[#allocation9 + $0x18] sm:$0xff]
        %v764 = vld [vmem:[#allocation9 + $0x20] sm:$0xff]
        %v765 = vld [vmem:[#allocation9 + $0x28] sm:$0xff]
        %v766 = vld [vmem:[#allocation9 + $0x30] sm:$0xff]
        %v767 = vld [vmem:[#allocation9 + $0x38] sm:$0xff]
        %v768 = vld [vmem:[#allocation9 + $0x40] sm:$0xff]
        %v769 = vld [vmem:[#allocation9 + $0x48] sm:$0xff]
        %v770 = vld [vmem:[#allocation9 + $0x50] sm:$0xff]
        %v771 = vld [vmem:[#allocation9 + $0x58] sm:$0xff]
        %v772 = vld [vmem:[#allocation9 + $0x60] sm:$0xff]
        %v773 = vld [vmem:[#allocation9 + $0x68] sm:$0xff]
        %v774 = vld [vmem:[#allocation9 + $0x70] sm:$0xff]
        %v775 = vld [vmem:[#allocation9 + $0x78] sm:$0xff]
        %v776 = vld [vmem:[%s9] sm:$0x1]
        %v778 = vlaneseq
        %v779 = vshrl.u32 %v778, 7
        %v780 = vsub.s32 0, %v779
        %v781 = vrot.slane %v776, %v780
        %783 = vmatprep.subr.mxu0 0.0
        %784 = vmatpush1.msra.mxu0 %v775
        %785 = vmatprep.subr.mxu0 0.0
        %786 = vmatpush1.msra.mxu0 %v774
        %787 = vmatprep.subr.mxu0 0.0
        %788 = vmatpush1.msra.mxu0 %v773
        %789 = vmatprep.subr.mxu0 0.0
        %790 = vmatpush1.msra.mxu0 %v772
        %791 = vmatprep.subr.mxu0 0.0
        %792 = vmatpush1.msra.mxu0 %v771
        %793 = vmatprep.subr.mxu0 0.0
        %794 = vmatpush1.msra.mxu0 %v770
        %795 = vmatprep.subr.mxu0 0.0
        %796 = vmatpush1.msra.mxu0 %v769
        %797 = vmatprep.subr.mxu0 0.0
        %798 = vmatpush1.msra.mxu0 %v768
        %799 = vmatprep.subr.mxu0 0.0
        %800 = vmatpush1.msra.mxu0 %v767
        %801 = vmatprep.subr.mxu0 0.0
        %802 = vmatpush1.msra.mxu0 %v766
        %803 = vmatprep.subr.mxu0 0.0
        %804 = vmatpush1.msra.mxu0 %v765
        %805 = vmatprep.subr.mxu0 0.0
        %806 = vmatpush1.msra.mxu0 %v764
        %807 = vmatprep.subr.mxu0 0.0
        %808 = vmatpush1.msra.mxu0 %v763
        %809 = vmatprep.subr.mxu0 0.0
        %810 = vmatpush1.msra.mxu0 %v762
        %811 = vmatprep.subr.mxu0 0.0
        %812 = vmatpush1.msra.mxu0 %v761
        %813 = vmatprep.subr.mxu0 0.0
        %814 = vmatpush1.msra.mxu0 %v760
        %815 = vmatprep.subr.mxu0 0.0
        %816 = vmatpush2.msra.mxu0 0.0
        %817 = vmatprep.subr.mxu0 0.0
        %818 = vmatpush2.msra.mxu0 0.0
        %819 = vmatprep.subr.mxu0 0.0
        %820 = vmatpush2.msra.mxu0 0.0
        %821 = vmatprep.subr.mxu0 0.0
        %822 = vmatpush2.msra.mxu0 0.0
        %823 = vmatprep.subr.mxu0 0.0
        %824 = vmatpush2.msra.mxu0 0.0
        %825 = vmatprep.subr.mxu0 0.0
        %826 = vmatpush2.msra.mxu0 0.0
        %827 = vmatprep.subr.mxu0 0.0
        %828 = vmatpush2.msra.mxu0 0.0
        %829 = vmatprep.subr.mxu0 0.0
        %830 = vmatpush2.msra.mxu0 0.0
        %831 = vmatprep.subr.mxu0 0.0
        %832 = vmatpush2.msra.mxu0 0.0
        %833 = vmatprep.subr.mxu0 0.0
        %834 = vmatpush2.msra.mxu0 0.0
        %835 = vmatprep.subr.mxu0 0.0
        %836 = vmatpush2.msra.mxu0 0.0
        %837 = vmatprep.subr.mxu0 0.0
        %838 = vmatpush2.msra.mxu0 0.0
        %839 = vmatprep.subr.mxu0 0.0
        %840 = vmatpush2.msra.mxu0 0.0
        %841 = vmatprep.subr.mxu0 0.0
        %842 = vmatpush2.msra.mxu0 0.0
        %843 = vmatprep.subr.mxu0 0.0
        %844 = vmatpush2.msra.mxu0 0.0
        %845 = vmatprep.subr.mxu0 0.0
        %846 = vmatpush2.msra.mxu0 0.0
        %847 = vmatprep.mubr.f32.mxu0 0.0
        %848 = vmatmul.mubr.f32.gmra.mxu0 %v759
        %v849 = vpop.f32.mrf.mxu0
        %v850 = vadd.f32 %v781, %v849
        %v851 = vpop.f32.mrf.mxu0
        %852 = vdwg.mxu0
        %853 = vst [vmem:[%s347] sm:$0xff] %v850
        %s854 = sand.u32 %s218, 1
        %s855 = scalar_lea.sflag [#allocation8], %s854
        %s856 = sand.u32 %s218, 1
        %s857 = smul.addr %s856, 8
        %s858 = scalar_lea.vmem [#allocation11], %s857
        // Predicated region
        $region77: #{tpu_custom_call.1} parent=51 // pred_check
          %p859 = pneg %p228
        $region78: #{tpu_custom_call.1} parent=51 // pred_check_branch
          %861 = sbr.rel (%p859) target = $region80
        $region79: #{tpu_custom_call.1} parent=51 // pred_region
          %s863 = ssub.s32 128, 128
          %864 = vsyncadd %s855, %s863
          %s865 = smul.addr %s32, 128
          %s866 = scalar_lea.hbm %s10, %s865
          %s868 = sshll.u32 %s858, 4
          %s869 = int_to_ptr.vmem [resolvable:$true] %s868
          %871 = dma.vmem_to_hbm [thread:$0]  %s869, 128, %s866, %s855
        $region80: #{tpu_custom_call.1} parent=51 // pred_fallthru
          _
      $region52: #{tpu_custom_call.1} parent=5 // pred_fallthru
        _
      %p872 = scmp.le.s32.totalorder 2, %s27
      // Predicated region
      $region81: #{tpu_custom_call.1} parent=5 // pred_check
        %p873 = pneg %p872
      $region82: #{tpu_custom_call.1} parent=5 // pred_check_branch
        %875 = sbr.rel (%p873) target = $region84
      $region83: #{tpu_custom_call.1} parent=5 // pred_region
        %s876 = ssub.s32 %s27, 2
        // Predicated region
        $region85: #{tpu_custom_call.1} parent=83 // pred_check
          %p877 = pneg %p234
        $region86: #{tpu_custom_call.1} parent=83 // pred_check_branch
          %879 = sbr.rel (%p877) target = $region88
        $region87: #{tpu_custom_call.1} parent=83 // pred_region
          %s880 = sand.u32 %s219, 1
          %s881 = scalar_lea.sflag [#allocation8], %s880
          %s882 = sand.u32 %s219, 1
          %s883 = smul.addr %s882, 8
          %s884 = scalar_lea.vmem [#allocation11], %s883
          %885 = dma.done %s881, 128
        $region88: #{tpu_custom_call.1} parent=83 // pred_fallthru
          _
      $region84: #{tpu_custom_call.1} parent=5 // pred_fallthru
        _
    $region6: #{tpu_custom_call.1} parent=1 // loop_footer
      %s31 = sadd.s32 1, %s27
    $region7: #{tpu_custom_call.1} parent=1 // loop_footer_branch
      %26 = sbr.rel target = $region3
    $region8: #{tpu_custom_call.1} parent=1 // loop_exit
      _
    %886 = vsyncpa [#allocation7], 1
    %s887 = scalar_lea.sflag [#allocation7], 1
    %888 = vsyncpa %s887, 1
    %889 = vsyncpa [#allocation10], 1
    %890 = vsyncpa [#allocation8], 1
    %s891 = scalar_lea.sflag [#allocation8], 1
    %892 = vsyncpa %s891, 1
  %893 = vsyncmov [#allocation3]
  %s894 = vpop.sfrf %893
  %p895 = scmp.eq.s32.totalorder %s894, 0
  %p896 = pneg %p895
  %898 = shalt.err (%p896)
  %s899 = scalar_lea.sflag [#allocation3], 1
  %900 = vsyncmov %s899
  %s901 = vpop.sfrf %900
  %p902 = scmp.eq.s32.totalorder %s901, 0
  %p903 = pneg %p902
  %905 = shalt.err (%p903)

</llo_original>
